<compile_context>
chip_gen: v5e
topology: v5e:2x2
jax: 0.10.0
libtpu: 0.0.40
codegen_flags: <defaults>
</compile_context>

<pallas_src>
import math

import jax
import jax.numpy as jnp
from jax import lax
from jax.experimental import pallas as pl
from jax.experimental.pallas import tpu as pltpu

INP_DIM = 64
HID_DIM = 13
NUM_CLASSES = 10

OUT_WIDTH = 128      # lane-dense output slab: lanes [0:10]=y_pred, [64:128]=x_dec
DEC_OFFSET = 64

MAX_TILE_B = 8192    # ~12.6 MiB double-buffered at 8192 rows -> fits 32 MiB scoped VMEM


def _mynn_kernel(x_ref, w_enc_ref, b_enc_ref, w_cat_ref, b_cat_ref, out_ref):
    x = x_ref[...]                                               # (tile_b, 64) f32

    # Encoder + ReLU (MXU, f32 accumulation).
    h = jnp.dot(x, w_enc_ref[...], preferred_element_type=jnp.float32) + b_enc_ref[...]
    h = jnp.maximum(h, 0.0)                                      # (tile_b, 13)

    # Fused classifier+decoder: one (13, 128) matmul.
    # lanes 0:10 -> classifier logits, 64:128 -> decoder output, 10:64 -> zeros.
    z = jnp.dot(h, w_cat_ref[...], preferred_element_type=jnp.float32) + b_cat_ref[...]

    # Numerically-stable softmax restricted to the class lanes via a lane mask;
    # decoder lanes pass through untouched.  Division is exact so rows sum to 1.
    lane = lax.broadcasted_iota(jnp.int32, z.shape, dimension=1)
    is_cls = lane < NUM_CLASSES
    zc = jnp.where(is_cls, z, -jnp.inf)
    m = jnp.max(zc, axis=-1, keepdims=True)
    e = jnp.exp(zc - m)                                          # 0 on non-class lanes
    denom = jnp.sum(e, axis=-1, keepdims=True)
    y = e / denom

    # Single full-width (lane-dense) store of the whole slab.
    out_ref[...] = jnp.where(is_cls, y, z).astype(out_ref.dtype)


def _round_up(n, m):
    return ((n + m - 1) // m) * m


def _pick_tile(b):
    """>=2 grid steps when possible (v7x megacore), large tiles to amortize overhead."""
    if b <= 8:
        return 8
    half = _round_up(pl.cdiv(b, 2), 8)
    return min(MAX_TILE_B, half)


def _mynn_pallas_2d(x2, params, tile_b=None):
    """x2: (B, 64) f32. Returns ((B, 10), (B, 64)) f32 via a batch-tiled pallas_call."""
    w_enc, b_enc, w_cls, b_cls, w_dec, b_dec = params
    B = x2.shape[0]

    if tile_b is None:
        tile_b = _pick_tile(B)
    tile_b = max(8, _round_up(int(tile_b), 8))
    num_tiles = pl.cdiv(B, tile_b)   # partial last block handled by Pallas masking

    # Fuse the two second-stage linears into one lane-dense (13, 128) operand.
    w_cat = jnp.zeros((HID_DIM, OUT_WIDTH), jnp.float32)
    w_cat = w_cat.at[:, :NUM_CLASSES].set(w_cls.astype(jnp.float32))
    w_cat = w_cat.at[:, DEC_OFFSET:].set(w_dec.astype(jnp.float32))
    b_cat = jnp.zeros((1, OUT_WIDTH), jnp.float32)
    b_cat = b_cat.at[:, :NUM_CLASSES].set(b_cls.astype(jnp.float32))
    b_cat = b_cat.at[:, DEC_OFFSET:].set(b_dec.astype(jnp.float32))

    # Advisory cost for XLA scheduling around the custom call.
    flops = 2 * B * (INP_DIM * HID_DIM + HID_DIM * OUT_WIDTH)
    bytes_accessed = 4 * (B * (INP_DIM + OUT_WIDTH)
                          + INP_DIM * HID_DIM + HID_DIM
                          + HID_DIM * OUT_WIDTH + OUT_WIDTH)
    transcendentals = B * NUM_CLASSES

    # Explicit scoped-VMEM budget: double-buffered x tile + output slab + weights.
    vmem_need = 2 * tile_b * (INP_DIM + OUT_WIDTH) * 4 + (1 << 20)
    vmem_limit = int(min(48 << 20, max(32 << 20, vmem_need)))

    resident = lambda i: (0, 0)   # weights/biases: fetched once, stay in VMEM
    batched = lambda i: (i, 0)    # batch-streamed operands

    slab = pl.pallas_call(
        _mynn_kernel,
        out_shape=jax.ShapeDtypeStruct((B, OUT_WIDTH), jnp.float32),
        grid=(num_tiles,),
        in_specs=[
            pl.BlockSpec((tile_b, INP_DIM), batched),        # x
            pl.BlockSpec((INP_DIM, HID_DIM), resident),      # w_enc
            pl.BlockSpec((1, HID_DIM), resident),            # b_enc
            pl.BlockSpec((HID_DIM, OUT_WIDTH), resident),    # w_cat (cls|pad|dec)
            pl.BlockSpec((1, OUT_WIDTH), resident),          # b_cat
        ],
        out_specs=pl.BlockSpec((tile_b, OUT_WIDTH), batched),
        compiler_params=pltpu.CompilerParams(
            dimension_semantics=("parallel",),
            vmem_limit_bytes=vmem_limit),
        cost_estimate=pl.CostEstimate(
            flops=flops,
            bytes_accessed=bytes_accessed,
            transcendentals=transcendentals),
    )(x2, w_enc, b_enc, w_cat, b_cat)

    y_pred = slab[:, :NUM_CLASSES]
    x_dec = slab[:, DEC_OFFSET:]
    return y_pred, x_dec


def mynn_forward(x, params, tile_b=None):
    """Matches MyNN.forward: >2-D inputs are flattened per-sample; <=2-D inputs
    are fully flattened to a single 1-D sample (nn.Flatten(start_dim=0))."""
    if x.ndim > 2:
        x2 = x.reshape(x.shape[0], -1).astype(jnp.float32)
        squeeze = False
    else:
        x2 = x.reshape(1, -1).astype(jnp.float32)
        squeeze = True
    assert x2.shape[1] == INP_DIM, (
        f"flattened feature dim must be {INP_DIM}, got {x2.shape[1]}")

    y_pred, x_dec = _mynn_pallas_2d(x2, params, tile_b)
    if squeeze:
        y_pred, x_dec = y_pred[0], x_dec[0]
    return y_pred, x_dec


def init_params(key):
    """nn.Linear default init U(-1/sqrt(fan_in), 1/sqrt(fan_in)).
    Weights stored pre-transposed as (in_features, out_features)."""
    ks = jax.random.split(key, 6)

    def lin(kw, kb, fan_in, fan_out):
        bound = 1.0 / math.sqrt(fan_in)
        w = jax.random.uniform(kw, (fan_in, fan_out), jnp.float32, -bound, bound)
        b = jax.random.uniform(kb, (1, fan_out), jnp.float32, -bound, bound)
        return w, b

    w_enc, b_enc = lin(ks[0], ks[1], INP_DIM, HID_DIM)
    w_cls, b_cls = lin(ks[2], ks[3], HID_DIM, NUM_CLASSES)
    w_dec, b_dec = lin(ks[4], ks[5], HID_DIM, INP_DIM)
    return (w_enc, b_enc, w_cls, b_cls, w_dec, b_dec)


def _reference_forward(x, params):
    """Pure-JAX reference with the same flatten semantics as the PyTorch module."""
    w_enc, b_enc, w_cls, b_cls, w_dec, b_dec = params
    hi = jax.lax.Precision.HIGHEST
    if x.ndim > 2:
        x2 = x.reshape(x.shape[0], -1)
        squeeze = False
    else:
        x2 = x.reshape(1, -1)
        squeeze = True
    h = jnp.maximum(jnp.dot(x2, w_enc, precision=hi) + b_enc, 0.0)
    y_pred = jax.nn.softmax(jnp.dot(h, w_cls, precision=hi) + b_cls, axis=-1)
    x_dec = jnp.dot(h, w_dec, precision=hi) + b_dec
    if squeeze:
        y_pred, x_dec = y_pred[0], x_dec[0]
    return y_pred, x_dec


if __name__ == "__main__":
    key = jax.random.PRNGKey(0)
    k_param, k_x1, k_x2, k_x3 = jax.random.split(key, 4)
    params = init_params(k_param)

    # Test 1: NCHW-style input (2, 4, 4, 4) -> flattens to (2, 64); single-tile grid.
    x1 = jax.random.normal(k_x1, (2, 4, 4, 4), dtype=jnp.float32)
    y1, d1 = mynn_forward(x1, params)
    jax.block_until_ready((y1, d1))
    y1r, d1r = _reference_forward(x1, params)
    assert y1.shape == (2, NUM_CLASSES) and d1.shape == (2, INP_DIM)
    assert jnp.allclose(y1, y1r, atol=2e-3, rtol=2e-3)
    assert jnp.allclose(d1, d1r, atol=2e-3, rtol=2e-3)
    assert jnp.allclose(jnp.sum(y1, axis=-1), 1.0, atol=1e-4)

    # Test 2: ragged batch + explicit small tile -> 5 grid steps with a masked
    # partial last block (B=37, tile_b=8).
    x2 = jax.random.normal(k_x2, (37, 8, 8), dtype=jnp.float32)
    y2, d2 = mynn_forward(x2, params, tile_b=8)
    jax.block_until_ready((y2, d2))
    y2r, d2r = _reference_forward(x2, params)
    assert y2.shape == (37, NUM_CLASSES) and d2.shape == (37, INP_DIM)
    assert jnp.allclose(y2, y2r, atol=2e-3, rtol=2e-3)
    assert jnp.allclose(d2, d2r, atol=2e-3, rtol=2e-3)
    assert jnp.allclose(jnp.sum(y2, axis=-1), 1.0, atol=1e-4)

    # Test 2b: default tile selection -> 2 tiles of 24 rows (>=2 tiles for megacore).
    y2b, d2b = mynn_forward(x2, params)
    jax.block_until_ready((y2b, d2b))
    assert jnp.allclose(y2b, y2r, atol=2e-3, rtol=2e-3)
    assert jnp.allclose(d2b, d2r, atol=2e-3, rtol=2e-3)

    # Test 3: 1-D input -> nn.Flatten(start_dim=0) path, 1-D outputs (like PyTorch).
    x3 = jax.random.normal(k_x3, (INP_DIM,), dtype=jnp.float32)
    y3, d3 = mynn_forward(x3, params)
    jax.block_until_ready((y3, d3))
    y3r, d3r = _reference_forward(x3, params)
    assert y3.shape == (NUM_CLASSES,) and d3.shape == (INP_DIM,)
    assert jnp.allclose(y3, y3r, atol=2e-3, rtol=2e-3)
    assert jnp.allclose(d3, d3r, atol=2e-3, rtol=2e-3)
    assert jnp.allclose(jnp.sum(y3), 1.0, atol=1e-4)

    print("KERNEL_OK")
</pallas_src>

<mosaic_0001>
module attributes {stable_mosaic.version = 11 : i64} {
  func.func @_mynn_kernel(%arg0: i32, %arg1: memref<8x64xf32, #tpu.memory_space<vmem>>, %arg2: memref<64x13xf32, #tpu.memory_space<vmem>>, %arg3: memref<1x13xf32, #tpu.memory_space<vmem>>, %arg4: memref<13x128xf32, #tpu.memory_space<vmem>>, %arg5: memref<1x128xf32, #tpu.memory_space<vmem>>, %arg6: memref<8x128xf32, #tpu.memory_space<vmem>>) attributes {dimension_semantics = [#tpu.dimension_semantics<parallel>], iteration_bounds = array<i64: 1>, scalar_prefetch = 0 : i64, scratch_operands = 0 : i64, tpu.core_type = #tpu.core_type<tc>, window_params = [{transform_indices = @transform_0, window_bounds = array<i64: 8, 64>}, {pipeline_mode = #tpu.pipeline_mode<synchronous>, transform_indices = @transform_1, window_bounds = array<i64: 64, 13>}, {pipeline_mode = #tpu.pipeline_mode<synchronous>, transform_indices = @transform_2, window_bounds = array<i64: 1, 13>}, {pipeline_mode = #tpu.pipeline_mode<synchronous>, transform_indices = @transform_3, window_bounds = array<i64: 13, 128>}, {pipeline_mode = #tpu.pipeline_mode<synchronous>, transform_indices = @transform_4, window_bounds = array<i64: 1, 128>}, {transform_indices = @transform_5, window_bounds = array<i64: 8, 128>}]} {
    %c0 = arith.constant 0 : index
    %c0_0 = arith.constant 0 : index
    %0 = vector.load %arg1[%c0, %c0_0] : memref<8x64xf32, #tpu.memory_space<vmem>>, vector<8x64xf32>
    %c0_1 = arith.constant 0 : index
    %c0_2 = arith.constant 0 : index
    %1 = vector.load %arg2[%c0_1, %c0_2] : memref<64x13xf32, #tpu.memory_space<vmem>>, vector<64x13xf32>
    %cst = arith.constant dense<0.000000e+00> : vector<8x13xf32>
    %2 = tpu.matmul %0, %1, %cst {dimension_numbers = #tpu.dot_dimension_numbers<[1], [0], [0], [1], [0, 0, 1, 1], [], []>} : vector<8x64xf32>, vector<64x13xf32>, vector<8x13xf32> -> vector<8x13xf32>
    %c0_3 = arith.constant 0 : index
    %c0_4 = arith.constant 0 : index
    %3 = vector.load %arg3[%c0_3, %c0_4] : memref<1x13xf32, #tpu.memory_space<vmem>>, vector<1x13xf32>
    %4 = vector.broadcast %3 : vector<1x13xf32> to vector<8x13xf32>
    %5 = arith.addf %2, %4 : vector<8x13xf32>
    %cst_5 = arith.constant 0.000000e+00 : f32
    %6 = vector.broadcast %cst_5 : f32 to vector<8x13xf32>
    %7 = arith.maximumf %5, %6 : vector<8x13xf32>
    %c0_6 = arith.constant 0 : index
    %c0_7 = arith.constant 0 : index
    %8 = vector.load %arg4[%c0_6, %c0_7] : memref<13x128xf32, #tpu.memory_space<vmem>>, vector<13x128xf32>
    %cst_8 = arith.constant dense<0.000000e+00> : vector<8x128xf32>
    %9 = tpu.matmul %7, %8, %cst_8 {dimension_numbers = #tpu.dot_dimension_numbers<[1], [0], [0], [1], [0, 0, 1, 1], [], []>} : vector<8x13xf32>, vector<13x128xf32>, vector<8x128xf32> -> vector<8x128xf32>
    %c0_9 = arith.constant 0 : index
    %c0_10 = arith.constant 0 : index
    %10 = vector.load %arg5[%c0_9, %c0_10] : memref<1x128xf32, #tpu.memory_space<vmem>>, vector<1x128xf32>
    %11 = vector.broadcast %10 : vector<1x128xf32> to vector<8x128xf32>
    %12 = arith.addf %9, %11 : vector<8x128xf32>
    %13 = tpu.iota {dimensions = array<i32: 1>} : vector<8x128xi32>
    %c10_i32 = arith.constant 10 : i32
    %14 = vector.broadcast %c10_i32 : i32 to vector<8x128xi32>
    %15 = arith.cmpi slt, %13, %14 : vector<8x128xi32>
    %cst_11 = arith.constant 0xFF800000 : f32
    %16 = vector.broadcast %cst_11 : f32 to vector<8x128xf32>
    %17 = arith.select %15, %12, %16 : vector<8x128xi1>, vector<8x128xf32>
    %cst_12 = arith.constant dense<0xFF800000> : vector<8xf32>
    %18 = vector.multi_reduction <maximumf>, %17, %cst_12 [1] : vector<8x128xf32> to vector<8xf32>
    %19 = vector.shape_cast %18 : vector<8xf32> to vector<8x1xf32>
    %20 = vector.broadcast %19 : vector<8x1xf32> to vector<8x128xf32>
    %21 = arith.subf %17, %20 : vector<8x128xf32>
    %22 = math.exp %21 : vector<8x128xf32>
    %cst_13 = arith.constant dense<0.000000e+00> : vector<8xf32>
    %23 = vector.multi_reduction <add>, %22, %cst_13 [1] : vector<8x128xf32> to vector<8xf32>
    %24 = vector.shape_cast %23 : vector<8xf32> to vector<8x1xf32>
    %25 = vector.broadcast %24 : vector<8x1xf32> to vector<8x128xf32>
    %26 = arith.divf %22, %25 : vector<8x128xf32>
    %27 = arith.select %15, %26, %12 : vector<8x128xi1>, vector<8x128xf32>
    %c0_14 = arith.constant 0 : index
    %c0_15 = arith.constant 0 : index
    %28 = vector.load %arg6[%c0_14, %c0_15] : memref<8x128xf32, #tpu.memory_space<vmem>>, vector<8x128xf32>
    tpu.vector_store %arg6[%c0_14, %c0_15], %27 {strides = array<i32>} : memref<8x128xf32, #tpu.memory_space<vmem>>, vector<8x128xf32>,
    return
  }
  func.func @transform_0(%arg0: i32) -> (i32, i32) {
    %c0_i32 = arith.constant 0 : i32
    %c0_i32_0 = arith.constant 0 : i32
    return %arg0, %c0_i32 : i32, i32
  }
  func.func @transform_1(%arg0: i32) -> (i32, i32) {
    %c0_i32 = arith.constant 0 : i32
    %c0_i32_0 = arith.constant 0 : i32
    %c0_i32_1 = arith.constant 0 : i32
    return %c0_i32, %c0_i32_0 : i32, i32
  }
  func.func @transform_2(%arg0: i32) -> (i32, i32) {
    %c0_i32 = arith.constant 0 : i32
    %c0_i32_0 = arith.constant 0 : i32
    %c0_i32_1 = arith.constant 0 : i32
    return %c0_i32, %c0_i32_0 : i32, i32
  }
  func.func @transform_3(%arg0: i32) -> (i32, i32) {
    %c0_i32 = arith.constant 0 : i32
    %c0_i32_0 = arith.constant 0 : i32
    %c0_i32_1 = arith.constant 0 : i32
    return %c0_i32, %c0_i32_0 : i32, i32
  }
  func.func @transform_4(%arg0: i32) -> (i32, i32) {
    %c0_i32 = arith.constant 0 : i32
    %c0_i32_0 = arith.constant 0 : i32
    %c0_i32_1 = arith.constant 0 : i32
    return %c0_i32, %c0_i32_0 : i32, i32
  }
  func.func @transform_5(%arg0: i32) -> (i32, i32) {
    %c0_i32 = arith.constant 0 : i32
    %c0_i32_0 = arith.constant 0 : i32
    return %arg0, %c0_i32 : i32, i32
  }
}

</mosaic_0001>

<llo_original>
// kernel: tpu_custom_call.1
$region0: #{tpu_custom_call.1}
  #allocation0 [shape = 'u32[]', space=smem, size = 0x4, offset = 0x4, fixed_abs, tag = 'smem constant byte address 0x4 - core index']
  #allocation1 [shape = 'u32[72,128]{1,0:T(1,128)}', space=vmem, size = 0x9000, scoped, tag = 'internal scratch']
  %s0 = inlined_call_operand.vmem [shape: f32[2,64], index: 0, kind: input, shape index: {}]
  %s1 = inlined_call_operand.vmem [shape: f32[64,13], index: 1, kind: input, shape index: {}]
  %s2 = inlined_call_operand.vmem [shape: f32[1,13], index: 2, kind: input, shape index: {}]
  %s3 = inlined_call_operand.vmem [shape: f32[13,128], index: 3, kind: input, shape index: {}]
  %s4 = inlined_call_operand.vmem [shape: f32[1,128], index: 4, kind: input, shape index: {}]
  %s5 = inlined_call_operand.hbm [shape: f32[2,128], index: 5, kind: output, shape index: {}]
  %s6 = sld [smem:[#allocation0]]
  $region30: #{tpu_custom_call.1} parent=0
    _
  %s8 = ssub.s32 1, %s6
  %s9 = scalar_select 0, %s8, %s6
  $region1: #{tpu_custom_call.1} parent=0
    #allocation2 [shape = 'u8[4096]{0}', space=vmem, size = 0x1000, scoped, tag = 'output window, operand 0, single buffered']
    #allocation3 [shape = 's32[1]{0}', space=sflag, size = 0x4, scoped, tag = 'scoped memory for tpu_custom_call.1']
    %10 = vsyncpa [#allocation3], 0
    // Predicated region
    $region2: #{tpu_custom_call.1} parent=1 // pred_check
      _
    $region3: #{tpu_custom_call.1} parent=1 // pred_check_branch
      %12 = sbr.rel (0) target = $region5
    $region4: #{tpu_custom_call.1} parent=1 // pred_region
      _
    $region5: #{tpu_custom_call.1} parent=1 // pred_fallthru
      _
    // Predicated region
    $region6: #{tpu_custom_call.1} parent=1 // pred_check
      _
    $region7: #{tpu_custom_call.1} parent=1 // pred_check_branch
      %14 = sbr.rel (0) target = $region9
    $region8: #{tpu_custom_call.1} parent=1 // pred_region
      _
    $region9: #{tpu_custom_call.1} parent=1 // pred_fallthru
      _
    // Predicated region
    $region10: #{tpu_custom_call.1} parent=1 // pred_check
      _
    $region11: #{tpu_custom_call.1} parent=1 // pred_check_branch
      %16 = sbr.rel (0) target = $region13
    $region12: #{tpu_custom_call.1} parent=1 // pred_region
      _
    $region13: #{tpu_custom_call.1} parent=1 // pred_fallthru
      _
    // Predicated region
    $region14: #{tpu_custom_call.1} parent=1 // pred_check
      _
    $region15: #{tpu_custom_call.1} parent=1 // pred_check_branch
      %18 = sbr.rel (0) target = $region17
    $region16: #{tpu_custom_call.1} parent=1 // pred_region
      _
    $region17: #{tpu_custom_call.1} parent=1 // pred_fallthru
      _
    // Predicated region
    $region18: #{tpu_custom_call.1} parent=1 // pred_check
      _
    $region19: #{tpu_custom_call.1} parent=1 // pred_check_branch
      %20 = sbr.rel (0) target = $region21
    $region20: #{tpu_custom_call.1} parent=1 // pred_region
      _
    $region21: #{tpu_custom_call.1} parent=1 // pred_fallthru
      _
    %v21 = vld [vmem:[%s0] sm:$0xff]
    %v22 = vld [vmem:[%s1] sm:$0xff]
    %v23 = vld [vmem:[%s1 + $0x8] sm:$0xff]
    %v24 = vld [vmem:[%s1 + $0x10] sm:$0xff]
    %v25 = vld [vmem:[%s1 + $0x18] sm:$0xff]
    %v26 = vld [vmem:[%s1 + $0x20] sm:$0xff]
    %v27 = vld [vmem:[%s1 + $0x28] sm:$0xff]
    %v28 = vld [vmem:[%s1 + $0x30] sm:$0xff]
    %v29 = vld [vmem:[%s1 + $0x38] sm:$0xff]
    %v30 = vld [vmem:[%s2] sm:$0x1]
    %v32 = vperm.slane %v30, 0
    %vm34 = vcmask 523264
    %v36 = vsel %vm34, %v21, 0
    %38 = vmatpush.msra.mxu0 0.0
    %39 = vmatpush.msra.mxu0 0.0
    %40 = vmatpush.msra.mxu0 0.0
    %41 = vmatpush.msra.mxu0 0.0
    %42 = vmatpush.msra.mxu0 0.0
    %43 = vmatpush.msra.mxu0 0.0
    %44 = vmatpush.msra.mxu0 0.0
    %45 = vmatpush.msra.mxu0 0.0
    %46 = vmatpush.msra.mxu0 %v29
    %47 = vmatpush.msra.mxu0 %v28
    %48 = vmatpush.msra.mxu0 %v27
    %49 = vmatpush.msra.mxu0 %v26
    %50 = vmatpush.msra.mxu0 %v25
    %51 = vmatpush.msra.mxu0 %v24
    %52 = vmatpush.msra.mxu0 %v23
    %53 = vmatpush.msra.mxu0 %v22
    %54 = vmatmul.f32.gmra.mxu0 %v36
    %v55 = vpop.f32.mrf.mxu0
    %v56 = vadd.f32 %v32, %v55
    %57 = vdwg.mxu0
    %v58 = vmax.f32 %v56, 0.0
    %v59 = vld [vmem:[%s3] sm:$0xff]
    %v60 = vld [vmem:[%s3 + $0x8] sm:$0x1f]
    %v61 = vld [vmem:[%s4] sm:$0x1]
    %v63 = vperm.slane %v61, 0
    %vm65 = vcmask 105472
    %v67 = vsel %vm65, %v58, 0
    %vm69 = vcmask 1044480
    %v71 = vsel %vm69, %v60, 0
    %73 = vmatpush.msra.mxu0 0.0
    %74 = vmatpush.msra.mxu0 0.0
    %75 = vmatpush.msra.mxu0 0.0
    %76 = vmatpush.msra.mxu0 0.0
    %77 = vmatpush.msra.mxu0 0.0
    %78 = vmatpush.msra.mxu0 0.0
    %79 = vmatpush.msra.mxu0 0.0
    %80 = vmatpush.msra.mxu0 0.0
    %81 = vmatpush.msra.mxu0 0.0
    %82 = vmatpush.msra.mxu0 0.0
    %83 = vmatpush.msra.mxu0 0.0
    %84 = vmatpush.msra.mxu0 0.0
    %85 = vmatpush.msra.mxu0 0.0
    %86 = vmatpush.msra.mxu0 0.0
    %87 = vmatpush.msra.mxu0 %v71
    %88 = vmatpush.msra.mxu0 %v59
    %89 = vmatmul.f32.gmra.mxu0 %v67
    %v90 = vpop.f32.mrf.mxu0
    %v91 = vadd.f32 %v63, %v90
    %92 = vdwg.mxu0
    %v93 = vlaneseq
    %v94 = vand.u32 %v93, 127
    %vm95 = vcmp.lt.s32.totalorder %v94, 10
    %v96 = vsel %vm95, %v91, -inf
    %97 = vmax.xlane.f32.xlu0 %v96
    %v98 = vpop.xlane.xlu0 %97
    %v99 = vsub.f32 %v96, %v98
    %v100 = vmul.f32 %v99, 1.442695
    %v101 = vpow.pop %v100
    %102 = vadd.xlane.f32.xlu0 %v101
    %v103 = vpop.xlane.xlu0 %102
    %v104 = vrcp.pop %v103
    %v105 = vmul.f32 %v103, %v104
    %v106 = vsub.f32 1.0, %v105
    %v107 = vmul.f32 %v104, %v106
    %v108 = vadd.f32 %v104, %v107
    %vm109 = vweird.f32 %v103
    %vm110 = vweird.f32 %v104
    %vm111 = vmor %vm109, %vm110
    %v112 = vsel %vm111, %v104, %v108
    %v113 = vand.u32 2147483647, %v103
    %vm114 = vcmp.eq.f32.partialorder %v113, 8.507059e+37
    %v115 = vand.u32 %v103, 2147483648
    %v116 = vor.u32 1.1754944e-38, %v115
    %v117 = vsel %vm114, %v116, %v112
    %v118 = vmul.f32 %v101, %v117
    %v119 = vsel %vm95, %v118, %v91
    %120 = vst [vmem:[#allocation2] sm:$0xff] %v119
    // Predicated region
    $region22: #{tpu_custom_call.1} parent=1 // pred_check
      _
    $region23: #{tpu_custom_call.1} parent=1 // pred_check_branch
      %122 = sbr.rel (0) target = $region25
    $region24: #{tpu_custom_call.1} parent=1 // pred_region
      %124 = vsyncadd [#allocation3], 96
      %s125 = sshll.u32 [#allocation2], 4
      %s126 = int_to_ptr.vmem [resolvable:$true] %s125
      %s127 = sshll.u32 %s5, 4
      %s128 = int_to_ptr.hbm [resolvable:$true] %s127
      %133 = dma.vmem_to_hbm [thread:$0]  %s126, 32, %s128, [#allocation3], 32, 32, 2
    $region25: #{tpu_custom_call.1} parent=1 // pred_fallthru
      _
    // Predicated region
    $region26: #{tpu_custom_call.1} parent=1 // pred_check
      _
    $region27: #{tpu_custom_call.1} parent=1 // pred_check_branch
      %135 = sbr.rel (0) target = $region29
    $region28: #{tpu_custom_call.1} parent=1 // pred_region
      %137 = dma.done [#allocation3], 128
    $region29: #{tpu_custom_call.1} parent=1 // pred_fallthru
      _
    %138 = vsyncpa [#allocation3], 1

</llo_original>
